<compile_context>
chip_gen: v5e
topology: v5e:2x2
jax: 0.10.0
libtpu: 0.0.40
codegen_flags: <defaults>
</compile_context>

<pallas_src>
import jax
import jax.numpy as jnp
from jax.experimental import pallas as pl
from jax.experimental.pallas import tpu as pltpu


# ------------------------------- helpers ------------------------------------

def _round_up(x, m):
    return (x + m - 1) // m * m


def _pad_to(x, shape):
    pads = [(0, s - d) for d, s in zip(x.shape, shape)]
    return jnp.pad(x, pads)


def _full_spec(shape):
    # Whole-array block (single grid step): last two dims are either a
    # multiple of (8, 128) by construction or equal the full array dims.
    return pl.BlockSpec(shape, lambda i, _n=len(shape): (0,) * _n)


# ----------------------------- Pallas kernel --------------------------------

def _make_fused_kernel(T, Bp):
    """Fused student+teachers forward. T = number of teachers, Bp = padded batch."""

    def kernel(x_ref, wa_ref, ba_ref,
               we1_ref, be1_ref, we2_ref, be2_ref,
               wd1_ref, bd1_ref, wd2_ref, bd2_ref,
               h_ref, dft_ref):
        f32 = jnp.float32

        def relu(v):
            return jnp.maximum(v, 0.0)

        # align_s (n == 0) and align_t[n-1] (n >= 1): Linear + ReLU.
        aligned = [
            relu(jnp.dot(x_ref[n], wa_ref[n], preferred_element_type=f32)
                 + ba_ref[n])
            for n in range(1 + T)
        ]

        # Shared extractor on one concatenated slab: ((1+T)*Bp, chp).
        slab = jnp.concatenate(aligned, axis=0)
        h1 = relu(jnp.dot(slab, we1_ref[...], preferred_element_type=f32)
                  + be1_ref[...])
        h = jnp.dot(h1, we2_ref[...], preferred_element_type=f32) + be2_ref[...]
        h_ref[...] = h.astype(h_ref.dtype)

        # Per-teacher decoders dec_t[t]: Linear + ReLU + Linear.
        for t in range(T):
            ht = h[(1 + t) * Bp:(2 + t) * Bp, :]
            d1 = relu(jnp.dot(ht, wd1_ref[t], preferred_element_type=f32)
                      + bd1_ref[t])
            dft = (jnp.dot(d1, wd2_ref[t], preferred_element_type=f32)
                   + bd2_ref[t])
            dft_ref[t * Bp:(t + 1) * Bp, :] = dft.astype(dft_ref.dtype)

    return kernel


# ------------------------------ module wrapper -------------------------------

def _kaiming(key, fan_in, fan_out):
    # kaiming_normal_(nonlinearity='relu'): std = sqrt(2 / fan_in).
    # Stored as (in, out) == transpose of torch's (out, in).
    std = (2.0 / fan_in) ** 0.5
    return jax.random.normal(key, (fan_in, fan_out), dtype=jnp.float32) * std


def init_cfl_fc_params(key, cs, cts, ch):
    """Logical (unpadded) parameters, mirroring the PyTorch module."""
    params = {}
    keys = iter(jax.random.split(key, 4 + 6 * len(cts)))
    params["ws"] = _kaiming(next(keys), cs, ch)           # align_s
    params["bs"] = jnp.zeros((1, ch), jnp.float32)
    params["we1"] = _kaiming(next(keys), ch, ch)          # extractor
    params["be1"] = jnp.zeros((1, ch), jnp.float32)
    params["we2"] = _kaiming(next(keys), ch, ch)
    params["be2"] = jnp.zeros((1, ch), jnp.float32)
    params["teachers"] = []
    for ct in cts:
        params["teachers"].append({
            "wt": _kaiming(next(keys), ct, ch),           # align_t[i]
            "bt": jnp.zeros((1, ch), jnp.float32),
            "wd1": _kaiming(next(keys), ch, ct),          # dec_t[i]
            "bd1": jnp.zeros((1, ct), jnp.float32),
            "wd2": _kaiming(next(keys), ct, ct),
            "bd2": jnp.zeros((1, ct), jnp.float32),
        })
    return params


def pack_cfl_fc_params(params, cs, cts, ch):
    """One-time padding/stacking of parameters into lane-dense kernel operands."""
    T = len(cts)
    cip = _round_up(max(cs, max(cts)), 128)   # common padded input width
    chp = _round_up(ch, 128)                  # padded hidden width
    ctp = _round_up(max(cts), 128)            # common padded teacher width

    packed = {
        "cs": cs, "cts": tuple(cts), "ch": ch,
        "cip": cip, "chp": chp, "ctp": ctp,
        # align weights: index 0 = student, 1..T = teachers
        "wa": jnp.stack([_pad_to(params["ws"], (cip, chp))]
                        + [_pad_to(t["wt"], (cip, chp))
                           for t in params["teachers"]]),
        "ba": jnp.stack([_pad_to(params["bs"], (1, chp))]
                        + [_pad_to(t["bt"], (1, chp))
                           for t in params["teachers"]]),
        # shared extractor
        "we1": _pad_to(params["we1"], (chp, chp)),
        "be1": _pad_to(params["be1"], (1, chp)),
        "we2": _pad_to(params["we2"], (chp, chp)),
        "be2": _pad_to(params["be2"], (1, chp)),
        # per-teacher decoders
        "wd1": jnp.stack([_pad_to(t["wd1"], (chp, ctp))
                          for t in params["teachers"]]),
        "bd1": jnp.stack([_pad_to(t["bd1"], (1, ctp))
                          for t in params["teachers"]]),
        "wd2": jnp.stack([_pad_to(t["wd2"], (ctp, ctp))
                          for t in params["teachers"]]),
        "bd2": jnp.stack([_pad_to(t["bd2"], (1, ctp))
                          for t in params["teachers"]]),
    }
    return packed


def cfl_fc_forward(packed, fs, fts):
    """Pallas implementation of CFL_FCBlock.forward.

    Returns ((hs, hts), (_fts, fts)) matching the PyTorch module.
    """
    cs, cts, ch = packed["cs"], packed["cts"], packed["ch"]
    cip, chp, ctp = packed["cip"], packed["chp"], packed["ctp"]
    T = len(cts)
    B = fs.shape[0]
    Bp = _round_up(max(B, 8), 8)

    # Stack student + teacher inputs into one lane/sublane-padded block.
    x_all = jnp.stack([_pad_to(fs, (Bp, cip))]
                      + [_pad_to(ft, (Bp, cip)) for ft in fts])   # (1+T, Bp, cip)

    args = (x_all, packed["wa"], packed["ba"],
            packed["we1"], packed["be1"], packed["we2"], packed["be2"],
            packed["wd1"], packed["bd1"], packed["wd2"], packed["bd2"])

    h_out, dft_out = pl.pallas_call(
        _make_fused_kernel(T, Bp),
        out_shape=(jax.ShapeDtypeStruct(((1 + T) * Bp, chp), jnp.float32),
                   jax.ShapeDtypeStruct((T * Bp, ctp), jnp.float32)),
        grid=(1,),
        in_specs=[_full_spec(a.shape) for a in args],
        out_specs=(_full_spec(((1 + T) * Bp, chp)),
                   _full_spec((T * Bp, ctp))),
        compiler_params=pltpu.CompilerParams(
            dimension_semantics=("arbitrary",)),
    )(*args)

    # Slice the padding back off.
    hs = h_out[:B, :ch]
    hts = [h_out[(1 + t) * Bp:(1 + t) * Bp + B, :ch] for t in range(T)]
    dec_fts = [dft_out[t * Bp:t * Bp + B, :cts[t]] for t in range(T)]
    return (hs, hts), (dec_fts, fts)

# TODO(synk): for production-scale B/ch, add batch tiling with a real grid axis
# ("parallel" for megacore) and bf16 weights with f32 accumulation; at these toy
# sizes everything already fits a single VMEM-resident block.


# ------------------------------ reference (JAX) ------------------------------

def _ref_forward(params, fs, fts):
    def lin(x, w, b):
        return x @ w + b

    def extractor(x):
        return lin(jnp.maximum(lin(x, params["we1"], params["be1"]), 0.0),
                   params["we2"], params["be2"])

    aligned_s = jnp.maximum(lin(fs, params["ws"], params["bs"]), 0.0)
    hs = extractor(aligned_s)
    hts, dec_fts = [], []
    for ft, t in zip(fts, params["teachers"]):
        aligned_t = jnp.maximum(lin(ft, t["wt"], t["bt"]), 0.0)
        ht = extractor(aligned_t)
        dft = lin(jnp.maximum(lin(ht, t["wd1"], t["bd1"]), 0.0),
                  t["wd2"], t["bd2"])
        hts.append(ht)
        dec_fts.append(dft)
    return (hs, hts), (dec_fts, fts)


# ----------------------------------- main ------------------------------------

if __name__ == "__main__":
    B, cs, cts, ch = 8, 16, (24, 32), 32

    key = jax.random.PRNGKey(0)
    kp, kfs, kf0, kf1 = jax.random.split(key, 4)
    params = init_cfl_fc_params(kp, cs, cts, ch)
    packed = pack_cfl_fc_params(params, cs, cts, ch)

    fs = jax.random.normal(kfs, (B, cs), dtype=jnp.float32)
    fts = [jax.random.normal(kf0, (B, cts[0]), dtype=jnp.float32),
           jax.random.normal(kf1, (B, cts[1]), dtype=jnp.float32)]

    (hs, hts), (dec_fts, fts_out) = cfl_fc_forward(packed, fs, fts)
    jax.block_until_ready(hs)
    for a in hts + dec_fts:
        jax.block_until_ready(a)

    # sanity check against a pure-JAX reference
    (hs_r, hts_r), (dec_r, _) = _ref_forward(params, fs, fts)
    assert jnp.allclose(hs, hs_r, atol=1e-4, rtol=1e-4)
    for a, b in zip(hts, hts_r):
        assert jnp.allclose(a, b, atol=1e-4, rtol=1e-4)
    for a, b in zip(dec_fts, dec_r):
        assert jnp.allclose(a, b, atol=1e-4, rtol=1e-4)

    print("KERNEL_OK")
</pallas_src>

<mosaic_0001>
module attributes {stable_mosaic.version = 11 : i64} {
  func.func @kernel(%arg0: i32, %arg1: memref<3x8x128xf32, #tpu.memory_space<vmem>>, %arg2: memref<3x128x128xf32, #tpu.memory_space<vmem>>, %arg3: memref<3x1x128xf32, #tpu.memory_space<vmem>>, %arg4: memref<128x128xf32, #tpu.memory_space<vmem>>, %arg5: memref<1x128xf32, #tpu.memory_space<vmem>>, %arg6: memref<128x128xf32, #tpu.memory_space<vmem>>, %arg7: memref<1x128xf32, #tpu.memory_space<vmem>>, %arg8: memref<2x128x128xf32, #tpu.memory_space<vmem>>, %arg9: memref<2x1x128xf32, #tpu.memory_space<vmem>>, %arg10: memref<2x128x128xf32, #tpu.memory_space<vmem>>, %arg11: memref<2x1x128xf32, #tpu.memory_space<vmem>>, %arg12: memref<24x128xf32, #tpu.memory_space<vmem>>, %arg13: memref<16x128xf32, #tpu.memory_space<vmem>>) attributes {dimension_semantics = [#tpu.dimension_semantics<arbitrary>], iteration_bounds = array<i64: 1>, scalar_prefetch = 0 : i64, scratch_operands = 0 : i64, tpu.core_type = #tpu.core_type<tc>, window_params = [{pipeline_mode = #tpu.pipeline_mode<synchronous>, transform_indices = @transform_0, window_bounds = array<i64: 3, 8, 128>}, {pipeline_mode = #tpu.pipeline_mode<synchronous>, transform_indices = @transform_1, window_bounds = array<i64: 3, 128, 128>}, {pipeline_mode = #tpu.pipeline_mode<synchronous>, transform_indices = @transform_2, window_bounds = array<i64: 3, 1, 128>}, {pipeline_mode = #tpu.pipeline_mode<synchronous>, transform_indices = @transform_3, window_bounds = array<i64: 128, 128>}, {pipeline_mode = #tpu.pipeline_mode<synchronous>, transform_indices = @transform_4, window_bounds = array<i64: 1, 128>}, {pipeline_mode = #tpu.pipeline_mode<synchronous>, transform_indices = @transform_5, window_bounds = array<i64: 128, 128>}, {pipeline_mode = #tpu.pipeline_mode<synchronous>, transform_indices = @transform_6, window_bounds = array<i64: 1, 128>}, {pipeline_mode = #tpu.pipeline_mode<synchronous>, transform_indices = @transform_7, window_bounds = array<i64: 2, 128, 128>}, {pipeline_mode = #tpu.pipeline_mode<synchronous>, transform_indices = @transform_8, window_bounds = array<i64: 2, 1, 128>}, {pipeline_mode = #tpu.pipeline_mode<synchronous>, transform_indices = @transform_9, window_bounds = array<i64: 2, 128, 128>}, {pipeline_mode = #tpu.pipeline_mode<synchronous>, transform_indices = @transform_10, window_bounds = array<i64: 2, 1, 128>}, {pipeline_mode = #tpu.pipeline_mode<synchronous>, transform_indices = @transform_11, window_bounds = array<i64: 24, 128>}, {pipeline_mode = #tpu.pipeline_mode<synchronous>, transform_indices = @transform_12, window_bounds = array<i64: 16, 128>}]} {
    %c0 = arith.constant 0 : index
    %c0_0 = arith.constant 0 : index
    %c0_1 = arith.constant 0 : index
    %0 = vector.load %arg1[%c0, %c0_0, %c0_1] : memref<3x8x128xf32, #tpu.memory_space<vmem>>, vector<1x8x128xf32>
    %1 = vector.shape_cast %0 : vector<1x8x128xf32> to vector<8x128xf32>
    %c0_2 = arith.constant 0 : index
    %c0_3 = arith.constant 0 : index
    %c0_4 = arith.constant 0 : index
    %2 = vector.load %arg2[%c0_2, %c0_3, %c0_4] : memref<3x128x128xf32, #tpu.memory_space<vmem>>, vector<1x128x128xf32>
    %3 = vector.shape_cast %2 : vector<1x128x128xf32> to vector<128x128xf32>
    %cst = arith.constant dense<0.000000e+00> : vector<8x128xf32>
    %4 = tpu.matmul %1, %3, %cst {dimension_numbers = #tpu.dot_dimension_numbers<[1], [0], [0], [1], [0, 0, 1, 1], [], []>} : vector<8x128xf32>, vector<128x128xf32>, vector<8x128xf32> -> vector<8x128xf32>
    %c0_5 = arith.constant 0 : index
    %c0_6 = arith.constant 0 : index
    %c0_7 = arith.constant 0 : index
    %5 = vector.load %arg3[%c0_5, %c0_6, %c0_7] : memref<3x1x128xf32, #tpu.memory_space<vmem>>, vector<1x1x128xf32>
    %6 = vector.shape_cast %5 : vector<1x1x128xf32> to vector<1x128xf32>
    %7 = vector.broadcast %6 : vector<1x128xf32> to vector<8x128xf32>
    %8 = arith.addf %4, %7 : vector<8x128xf32>
    %cst_8 = arith.constant 0.000000e+00 : f32
    %9 = vector.broadcast %cst_8 : f32 to vector<8x128xf32>
    %10 = arith.maximumf %8, %9 : vector<8x128xf32>
    %c1 = arith.constant 1 : index
    %c0_9 = arith.constant 0 : index
    %c0_10 = arith.constant 0 : index
    %11 = vector.load %arg1[%c1, %c0_9, %c0_10] : memref<3x8x128xf32, #tpu.memory_space<vmem>>, vector<1x8x128xf32>
    %12 = vector.shape_cast %11 : vector<1x8x128xf32> to vector<8x128xf32>
    %c1_11 = arith.constant 1 : index
    %c0_12 = arith.constant 0 : index
    %c0_13 = arith.constant 0 : index
    %13 = vector.load %arg2[%c1_11, %c0_12, %c0_13] : memref<3x128x128xf32, #tpu.memory_space<vmem>>, vector<1x128x128xf32>
    %14 = vector.shape_cast %13 : vector<1x128x128xf32> to vector<128x128xf32>
    %cst_14 = arith.constant dense<0.000000e+00> : vector<8x128xf32>
    %15 = tpu.matmul %12, %14, %cst_14 {dimension_numbers = #tpu.dot_dimension_numbers<[1], [0], [0], [1], [0, 0, 1, 1], [], []>} : vector<8x128xf32>, vector<128x128xf32>, vector<8x128xf32> -> vector<8x128xf32>
    %c1_15 = arith.constant 1 : index
    %c0_16 = arith.constant 0 : index
    %c0_17 = arith.constant 0 : index
    %16 = vector.load %arg3[%c1_15, %c0_16, %c0_17] : memref<3x1x128xf32, #tpu.memory_space<vmem>>, vector<1x1x128xf32>
    %17 = vector.shape_cast %16 : vector<1x1x128xf32> to vector<1x128xf32>
    %18 = vector.broadcast %17 : vector<1x128xf32> to vector<8x128xf32>
    %19 = arith.addf %15, %18 : vector<8x128xf32>
    %cst_18 = arith.constant 0.000000e+00 : f32
    %20 = vector.broadcast %cst_18 : f32 to vector<8x128xf32>
    %21 = arith.maximumf %19, %20 : vector<8x128xf32>
    %c2 = arith.constant 2 : index
    %c0_19 = arith.constant 0 : index
    %c0_20 = arith.constant 0 : index
    %22 = vector.load %arg1[%c2, %c0_19, %c0_20] : memref<3x8x128xf32, #tpu.memory_space<vmem>>, vector<1x8x128xf32>
    %23 = vector.shape_cast %22 : vector<1x8x128xf32> to vector<8x128xf32>
    %c2_21 = arith.constant 2 : index
    %c0_22 = arith.constant 0 : index
    %c0_23 = arith.constant 0 : index
    %24 = vector.load %arg2[%c2_21, %c0_22, %c0_23] : memref<3x128x128xf32, #tpu.memory_space<vmem>>, vector<1x128x128xf32>
    %25 = vector.shape_cast %24 : vector<1x128x128xf32> to vector<128x128xf32>
    %cst_24 = arith.constant dense<0.000000e+00> : vector<8x128xf32>
    %26 = tpu.matmul %23, %25, %cst_24 {dimension_numbers = #tpu.dot_dimension_numbers<[1], [0], [0], [1], [0, 0, 1, 1], [], []>} : vector<8x128xf32>, vector<128x128xf32>, vector<8x128xf32> -> vector<8x128xf32>
    %c2_25 = arith.constant 2 : index
    %c0_26 = arith.constant 0 : index
    %c0_27 = arith.constant 0 : index
    %27 = vector.load %arg3[%c2_25, %c0_26, %c0_27] : memref<3x1x128xf32, #tpu.memory_space<vmem>>, vector<1x1x128xf32>
    %28 = vector.shape_cast %27 : vector<1x1x128xf32> to vector<1x128xf32>
    %29 = vector.broadcast %28 : vector<1x128xf32> to vector<8x128xf32>
    %30 = arith.addf %26, %29 : vector<8x128xf32>
    %cst_28 = arith.constant 0.000000e+00 : f32
    %31 = vector.broadcast %cst_28 : f32 to vector<8x128xf32>
    %32 = arith.maximumf %30, %31 : vector<8x128xf32>
    %33 = tpu.concatenate %10, %21, %32 in 0 : vector<8x128xf32>, vector<8x128xf32>, vector<8x128xf32> -> vector<24x128xf32>
    %c0_29 = arith.constant 0 : index
    %c0_30 = arith.constant 0 : index
    %34 = vector.load %arg4[%c0_29, %c0_30] : memref<128x128xf32, #tpu.memory_space<vmem>>, vector<128x128xf32>
    %cst_31 = arith.constant dense<0.000000e+00> : vector<24x128xf32>
    %35 = tpu.matmul %33, %34, %cst_31 {dimension_numbers = #tpu.dot_dimension_numbers<[1], [0], [0], [1], [0, 0, 1, 1], [], []>} : vector<24x128xf32>, vector<128x128xf32>, vector<24x128xf32> -> vector<24x128xf32>
    %c0_32 = arith.constant 0 : index
    %c0_33 = arith.constant 0 : index
    %36 = vector.load %arg5[%c0_32, %c0_33] : memref<1x128xf32, #tpu.memory_space<vmem>>, vector<1x128xf32>
    %37 = vector.broadcast %36 : vector<1x128xf32> to vector<24x128xf32>
    %38 = arith.addf %35, %37 : vector<24x128xf32>
    %cst_34 = arith.constant 0.000000e+00 : f32
    %39 = vector.broadcast %cst_34 : f32 to vector<24x128xf32>
    %40 = arith.maximumf %38, %39 : vector<24x128xf32>
    %c0_35 = arith.constant 0 : index
    %c0_36 = arith.constant 0 : index
    %41 = vector.load %arg6[%c0_35, %c0_36] : memref<128x128xf32, #tpu.memory_space<vmem>>, vector<128x128xf32>
    %cst_37 = arith.constant dense<0.000000e+00> : vector<24x128xf32>
    %42 = tpu.matmul %40, %41, %cst_37 {dimension_numbers = #tpu.dot_dimension_numbers<[1], [0], [0], [1], [0, 0, 1, 1], [], []>} : vector<24x128xf32>, vector<128x128xf32>, vector<24x128xf32> -> vector<24x128xf32>
    %c0_38 = arith.constant 0 : index
    %c0_39 = arith.constant 0 : index
    %43 = vector.load %arg7[%c0_38, %c0_39] : memref<1x128xf32, #tpu.memory_space<vmem>>, vector<1x128xf32>
    %44 = vector.broadcast %43 : vector<1x128xf32> to vector<24x128xf32>
    %45 = arith.addf %42, %44 : vector<24x128xf32>
    %c0_40 = arith.constant 0 : index
    %c0_41 = arith.constant 0 : index
    %46 = vector.load %arg12[%c0_40, %c0_41] : memref<24x128xf32, #tpu.memory_space<vmem>>, vector<24x128xf32>
    tpu.vector_store %arg12[%c0_40, %c0_41], %45 {strides = array<i32>} : memref<24x128xf32, #tpu.memory_space<vmem>>, vector<24x128xf32>,
    %47 = vector.extract_strided_slice %45 {offsets = [8, 0], sizes = [8, 128], strides = [1, 1]} : vector<24x128xf32> to vector<8x128xf32>
    %c0_42 = arith.constant 0 : index
    %c0_43 = arith.constant 0 : index
    %c0_44 = arith.constant 0 : index
    %48 = vector.load %arg8[%c0_42, %c0_43, %c0_44] : memref<2x128x128xf32, #tpu.memory_space<vmem>>, vector<1x128x128xf32>
    %49 = vector.shape_cast %48 : vector<1x128x128xf32> to vector<128x128xf32>
    %cst_45 = arith.constant dense<0.000000e+00> : vector<8x128xf32>
    %50 = tpu.matmul %47, %49, %cst_45 {dimension_numbers = #tpu.dot_dimension_numbers<[1], [0], [0], [1], [0, 0, 1, 1], [], []>} : vector<8x128xf32>, vector<128x128xf32>, vector<8x128xf32> -> vector<8x128xf32>
    %c0_46 = arith.constant 0 : index
    %c0_47 = arith.constant 0 : index
    %c0_48 = arith.constant 0 : index
    %51 = vector.load %arg9[%c0_46, %c0_47, %c0_48] : memref<2x1x128xf32, #tpu.memory_space<vmem>>, vector<1x1x128xf32>
    %52 = vector.shape_cast %51 : vector<1x1x128xf32> to vector<1x128xf32>
    %53 = vector.broadcast %52 : vector<1x128xf32> to vector<8x128xf32>
    %54 = arith.addf %50, %53 : vector<8x128xf32>
    %cst_49 = arith.constant 0.000000e+00 : f32
    %55 = vector.broadcast %cst_49 : f32 to vector<8x128xf32>
    %56 = arith.maximumf %54, %55 : vector<8x128xf32>
    %c0_50 = arith.constant 0 : index
    %c0_51 = arith.constant 0 : index
    %c0_52 = arith.constant 0 : index
    %57 = vector.load %arg10[%c0_50, %c0_51, %c0_52] : memref<2x128x128xf32, #tpu.memory_space<vmem>>, vector<1x128x128xf32>
    %58 = vector.shape_cast %57 : vector<1x128x128xf32> to vector<128x128xf32>
    %cst_53 = arith.constant dense<0.000000e+00> : vector<8x128xf32>
    %59 = tpu.matmul %56, %58, %cst_53 {dimension_numbers = #tpu.dot_dimension_numbers<[1], [0], [0], [1], [0, 0, 1, 1], [], []>} : vector<8x128xf32>, vector<128x128xf32>, vector<8x128xf32> -> vector<8x128xf32>
    %c0_54 = arith.constant 0 : index
    %c0_55 = arith.constant 0 : index
    %c0_56 = arith.constant 0 : index
    %60 = vector.load %arg11[%c0_54, %c0_55, %c0_56] : memref<2x1x128xf32, #tpu.memory_space<vmem>>, vector<1x1x128xf32>
    %61 = vector.shape_cast %60 : vector<1x1x128xf32> to vector<1x128xf32>
    %62 = vector.broadcast %61 : vector<1x128xf32> to vector<8x128xf32>
    %63 = arith.addf %59, %62 : vector<8x128xf32>
    %c0_57 = arith.constant 0 : index
    %c0_58 = arith.constant 0 : index
    %64 = vector.load %arg13[%c0_57, %c0_58] : memref<16x128xf32, #tpu.memory_space<vmem>>, vector<8x128xf32>
    tpu.vector_store %arg13[%c0_57, %c0_58], %63 {strides = array<i32>} : memref<16x128xf32, #tpu.memory_space<vmem>>, vector<8x128xf32>,
    %65 = vector.extract_strided_slice %45 {offsets = [16, 0], sizes = [8, 128], strides = [1, 1]} : vector<24x128xf32> to vector<8x128xf32>
    %c1_59 = arith.constant 1 : index
    %c0_60 = arith.constant 0 : index
    %c0_61 = arith.constant 0 : index
    %66 = vector.load %arg8[%c1_59, %c0_60, %c0_61] : memref<2x128x128xf32, #tpu.memory_space<vmem>>, vector<1x128x128xf32>
    %67 = vector.shape_cast %66 : vector<1x128x128xf32> to vector<128x128xf32>
    %cst_62 = arith.constant dense<0.000000e+00> : vector<8x128xf32>
    %68 = tpu.matmul %65, %67, %cst_62 {dimension_numbers = #tpu.dot_dimension_numbers<[1], [0], [0], [1], [0, 0, 1, 1], [], []>} : vector<8x128xf32>, vector<128x128xf32>, vector<8x128xf32> -> vector<8x128xf32>
    %c1_63 = arith.constant 1 : index
    %c0_64 = arith.constant 0 : index
    %c0_65 = arith.constant 0 : index
    %69 = vector.load %arg9[%c1_63, %c0_64, %c0_65] : memref<2x1x128xf32, #tpu.memory_space<vmem>>, vector<1x1x128xf32>
    %70 = vector.shape_cast %69 : vector<1x1x128xf32> to vector<1x128xf32>
    %71 = vector.broadcast %70 : vector<1x128xf32> to vector<8x128xf32>
    %72 = arith.addf %68, %71 : vector<8x128xf32>
    %cst_66 = arith.constant 0.000000e+00 : f32
    %73 = vector.broadcast %cst_66 : f32 to vector<8x128xf32>
    %74 = arith.maximumf %72, %73 : vector<8x128xf32>
    %c1_67 = arith.constant 1 : index
    %c0_68 = arith.constant 0 : index
    %c0_69 = arith.constant 0 : index
    %75 = vector.load %arg10[%c1_67, %c0_68, %c0_69] : memref<2x128x128xf32, #tpu.memory_space<vmem>>, vector<1x128x128xf32>
    %76 = vector.shape_cast %75 : vector<1x128x128xf32> to vector<128x128xf32>
    %cst_70 = arith.constant dense<0.000000e+00> : vector<8x128xf32>
    %77 = tpu.matmul %74, %76, %cst_70 {dimension_numbers = #tpu.dot_dimension_numbers<[1], [0], [0], [1], [0, 0, 1, 1], [], []>} : vector<8x128xf32>, vector<128x128xf32>, vector<8x128xf32> -> vector<8x128xf32>
    %c1_71 = arith.constant 1 : index
    %c0_72 = arith.constant 0 : index
    %c0_73 = arith.constant 0 : index
    %78 = vector.load %arg11[%c1_71, %c0_72, %c0_73] : memref<2x1x128xf32, #tpu.memory_space<vmem>>, vector<1x1x128xf32>
    %79 = vector.shape_cast %78 : vector<1x1x128xf32> to vector<1x128xf32>
    %80 = vector.broadcast %79 : vector<1x128xf32> to vector<8x128xf32>
    %81 = arith.addf %77, %80 : vector<8x128xf32>
    %c8 = arith.constant 8 : index
    %c0_74 = arith.constant 0 : index
    %82 = vector.load %arg13[%c8, %c0_74] : memref<16x128xf32, #tpu.memory_space<vmem>>, vector<8x128xf32>
    tpu.vector_store %arg13[%c8, %c0_74], %81 {strides = array<i32>} : memref<16x128xf32, #tpu.memory_space<vmem>>, vector<8x128xf32>,
    return
  }
  func.func @transform_0(%arg0: i32) -> (i32, i32, i32) {
    %c0_i32 = arith.constant 0 : i32
    %c0_i32_0 = arith.constant 0 : i32
    %c0_i32_1 = arith.constant 0 : i32
    %c0_i32_2 = arith.constant 0 : i32
    return %c0_i32, %c0_i32_0, %c0_i32_1 : i32, i32, i32
  }
  func.func @transform_1(%arg0: i32) -> (i32, i32, i32) {
    %c0_i32 = arith.constant 0 : i32
    %c0_i32_0 = arith.constant 0 : i32
    %c0_i32_1 = arith.constant 0 : i32
    %c0_i32_2 = arith.constant 0 : i32
    return %c0_i32, %c0_i32_0, %c0_i32_1 : i32, i32, i32
  }
  func.func @transform_2(%arg0: i32) -> (i32, i32, i32) {
    %c0_i32 = arith.constant 0 : i32
    %c0_i32_0 = arith.constant 0 : i32
    %c0_i32_1 = arith.constant 0 : i32
    %c0_i32_2 = arith.constant 0 : i32
    return %c0_i32, %c0_i32_0, %c0_i32_1 : i32, i32, i32
  }
  func.func @transform_3(%arg0: i32) -> (i32, i32) {
    %c0_i32 = arith.constant 0 : i32
    %c0_i32_0 = arith.constant 0 : i32
    %c0_i32_1 = arith.constant 0 : i32
    return %c0_i32, %c0_i32_0 : i32, i32
  }
  func.func @transform_4(%arg0: i32) -> (i32, i32) {
    %c0_i32 = arith.constant 0 : i32
    %c0_i32_0 = arith.constant 0 : i32
    %c0_i32_1 = arith.constant 0 : i32
    return %c0_i32, %c0_i32_0 : i32, i32
  }
  func.func @transform_5(%arg0: i32) -> (i32, i32) {
    %c0_i32 = arith.constant 0 : i32
    %c0_i32_0 = arith.constant 0 : i32
    %c0_i32_1 = arith.constant 0 : i32
    return %c0_i32, %c0_i32_0 : i32, i32
  }
  func.func @transform_6(%arg0: i32) -> (i32, i32) {
    %c0_i32 = arith.constant 0 : i32
    %c0_i32_0 = arith.constant 0 : i32
    %c0_i32_1 = arith.constant 0 : i32
    return %c0_i32, %c0_i32_0 : i32, i32
  }
  func.func @transform_7(%arg0: i32) -> (i32, i32, i32) {
    %c0_i32 = arith.constant 0 : i32
    %c0_i32_0 = arith.constant 0 : i32
    %c0_i32_1 = arith.constant 0 : i32
    %c0_i32_2 = arith.constant 0 : i32
    return %c0_i32, %c0_i32_0, %c0_i32_1 : i32, i32, i32
  }
  func.func @transform_8(%arg0: i32) -> (i32, i32, i32) {
    %c0_i32 = arith.constant 0 : i32
    %c0_i32_0 = arith.constant 0 : i32
    %c0_i32_1 = arith.constant 0 : i32
    %c0_i32_2 = arith.constant 0 : i32
    return %c0_i32, %c0_i32_0, %c0_i32_1 : i32, i32, i32
  }
  func.func @transform_9(%arg0: i32) -> (i32, i32, i32) {
    %c0_i32 = arith.constant 0 : i32
    %c0_i32_0 = arith.constant 0 : i32
    %c0_i32_1 = arith.constant 0 : i32
    %c0_i32_2 = arith.constant 0 : i32
    return %c0_i32, %c0_i32_0, %c0_i32_1 : i32, i32, i32
  }
  func.func @transform_10(%arg0: i32) -> (i32, i32, i32) {
    %c0_i32 = arith.constant 0 : i32
    %c0_i32_0 = arith.constant 0 : i32
    %c0_i32_1 = arith.constant 0 : i32
    %c0_i32_2 = arith.constant 0 : i32
    return %c0_i32, %c0_i32_0, %c0_i32_1 : i32, i32, i32
  }
  func.func @transform_11(%arg0: i32) -> (i32, i32) {
    %c0_i32 = arith.constant 0 : i32
    %c0_i32_0 = arith.constant 0 : i32
    %c0_i32_1 = arith.constant 0 : i32
    return %c0_i32, %c0_i32_0 : i32, i32
  }
  func.func @transform_12(%arg0: i32) -> (i32, i32) {
    %c0_i32 = arith.constant 0 : i32
    %c0_i32_0 = arith.constant 0 : i32
    %c0_i32_1 = arith.constant 0 : i32
    return %c0_i32, %c0_i32_0 : i32, i32
  }
}

</mosaic_0001>

<llo_original>
// kernel: tpu_custom_call.1
$region0: #{tpu_custom_call.1}
  #allocation0 [shape = 'u32[]', space=smem, size = 0x4, offset = 0x4, fixed_abs, tag = 'smem constant byte address 0x4 - core index']
  #allocation1 [shape = 'u32[72,128]{1,0:T(1,128)}', space=vmem, size = 0x9000, scoped, tag = 'internal scratch']
  %s0 = inlined_call_operand.hbm [shape: f32[3,8,128], index: 0, kind: input, shape index: {}]
  %s1 = inlined_call_operand.hbm [shape: f32[3,128,128], index: 1, kind: input, shape index: {}]
  %s2 = inlined_call_operand.hbm [shape: f32[3,1,128], index: 2, kind: input, shape index: {}]
  %s3 = inlined_call_operand.hbm [shape: f32[128,128], index: 3, kind: input, shape index: {}]
  %s4 = inlined_call_operand.hbm [shape: f32[1,128], index: 4, kind: input, shape index: {}]
  %s5 = inlined_call_operand.hbm [shape: f32[128,128], index: 5, kind: input, shape index: {}]
  %s6 = inlined_call_operand.vmem [shape: f32[1,128], index: 6, kind: input, shape index: {}]
  %s7 = inlined_call_operand.hbm [shape: f32[2,128,128], index: 7, kind: input, shape index: {}]
  %s8 = inlined_call_operand.vmem [shape: f32[2,1,128], index: 8, kind: input, shape index: {}]
  %s9 = inlined_call_operand.hbm [shape: f32[2,128,128], index: 9, kind: input, shape index: {}]
  %s10 = inlined_call_operand.vmem [shape: f32[2,1,128], index: 10, kind: input, shape index: {}]
  %s11 = inlined_call_operand.hbm [shape: f32[24,128], index: 11, kind: output, shape index: {0}]
  %s12 = inlined_call_operand.hbm [shape: f32[16,128], index: 12, kind: output, shape index: {1}]
  %13 = xla_tuple %s11, %s12
  %s14 = sld [smem:[#allocation0]]
  $region94: #{tpu_custom_call.1} parent=0
    _
  %s16 = ssub.s32 1, %s14
  %s17 = scalar_select 0, %s16, %s14
  $region1: #{tpu_custom_call.1} parent=0
    #allocation2 [shape = 'u8[12288]{0}', space=vmem, size = 0x3000, scoped, tag = 'input window, operand 0, single buffered']
    #allocation3 [shape = 's32[1]{0}', space=sflag, size = 0x4, scoped, tag = 'scoped memory for tpu_custom_call.1']
    #allocation4 [shape = 's32[1]{0}', space=sflag, size = 0x4, scoped, tag = 'scoped memory for tpu_custom_call.1']
    #allocation5 [shape = 'u8[196608]{0}', space=vmem, size = 0x30000, scoped, tag = 'input window, operand 1, single buffered']
    #allocation6 [shape = 's32[1]{0}', space=sflag, size = 0x4, scoped, tag = 'scoped memory for tpu_custom_call.1']
    #allocation7 [shape = 'u8[1536]{0}', space=vmem, size = 0x800, scoped, tag = 'input window, operand 2, single buffered']
    #allocation8 [shape = 'u8[65536]{0}', space=vmem, size = 0x10000, scoped, tag = 'input window, operand 3, single buffered']
    #allocation9 [shape = 's32[1]{0}', space=sflag, size = 0x4, scoped, tag = 'scoped memory for tpu_custom_call.1']
    #allocation10 [shape = 'u8[512]{0}', space=vmem, size = 0x400, scoped, tag = 'input window, operand 4, single buffered']
    #allocation11 [shape = 'u8[65536]{0}', space=vmem, size = 0x10000, scoped, tag = 'input window, operand 5, single buffered']
    #allocation12 [shape = 's32[1]{0}', space=sflag, size = 0x4, scoped, tag = 'scoped memory for tpu_custom_call.1']
    #allocation13 [shape = 'u8[131072]{0}', space=vmem, size = 0x20000, scoped, tag = 'input window, operand 7, single buffered']
    #allocation14 [shape = 'u8[131072]{0}', space=vmem, size = 0x20000, scoped, tag = 'input window, operand 9, single buffered']
    #allocation15 [shape = 's32[1]{0}', space=sflag, size = 0x4, scoped, tag = 'scoped memory for tpu_custom_call.1']
    #allocation16 [shape = 'u8[12288]{0}', space=vmem, size = 0x3000, scoped, tag = 'output window, operand 0, single buffered']
    #allocation17 [shape = 'u8[8192]{0}', space=vmem, size = 0x2000, scoped, tag = 'output window, operand 1, single buffered']
    #allocation18 [shape = 's32[1]{0}', space=sflag, size = 0x4, scoped, tag = 'scoped memory for tpu_custom_call.1']
    %18 = vsyncpa [#allocation3], 0
    %19 = vsyncpa [#allocation6], 0
    %20 = vsyncpa [#allocation9], 0
    %21 = vsyncpa [#allocation12], 0
    %22 = vsyncpa [#allocation15], 0
    %23 = vsyncpa [#allocation4], 0
    %24 = vsyncpa [#allocation18], 0
    // Predicated region
    $region2: #{tpu_custom_call.1} parent=1 // pred_check
      _
    $region3: #{tpu_custom_call.1} parent=1 // pred_check_branch
      %26 = sbr.rel (0) target = $region5
    $region4: #{tpu_custom_call.1} parent=1 // pred_region
      %28 = vsyncadd [#allocation3], 0
      %s29 = sshll.u32 %s0, 4
      %s30 = int_to_ptr.hbm [resolvable:$true] %s29
      %s31 = sshll.u32 [#allocation2], 4
      %s32 = int_to_ptr.vmem [resolvable:$true] %s31
      %37 = dma.hbm_to_vmem [thread:$0]  %s30, 384, %s32, [#allocation3], 128, 128, 8
    $region5: #{tpu_custom_call.1} parent=1 // pred_fallthru
      _
    // Predicated region
    $region6: #{tpu_custom_call.1} parent=1 // pred_check
      _
    $region7: #{tpu_custom_call.1} parent=1 // pred_check_branch
      %39 = sbr.rel (0) target = $region9
    $region8: #{tpu_custom_call.1} parent=1 // pred_region
      %41 = vsyncadd [#allocation6], 0
      %s42 = sshll.u32 %s1, 4
      %s43 = int_to_ptr.hbm [resolvable:$true] %s42
      %s44 = sshll.u32 [#allocation5], 4
      %s45 = int_to_ptr.vmem [resolvable:$true] %s44
      %50 = dma.hbm_to_vmem [thread:$0]  %s43, 6144, %s45, [#allocation6], 128, 128, 8
    $region9: #{tpu_custom_call.1} parent=1 // pred_fallthru
      _
    // Predicated region
    $region10: #{tpu_custom_call.1} parent=1 // pred_check
      _
    $region11: #{tpu_custom_call.1} parent=1 // pred_check_branch
      %52 = sbr.rel (0) target = $region13
    $region12: #{tpu_custom_call.1} parent=1 // pred_region
      %54 = vsyncadd [#allocation6], 0
      %s55 = sshll.u32 %s2, 4
      %s56 = int_to_ptr.hbm [resolvable:$true] %s55
      %s57 = sshll.u32 [#allocation7], 4
      %s58 = int_to_ptr.vmem [resolvable:$true] %s57
      %63 = dma.hbm_to_vmem [thread:$0]  %s56, 48, %s58, [#allocation6], 16, 16, 1
    $region13: #{tpu_custom_call.1} parent=1 // pred_fallthru
      _
    // Predicated region
    $region14: #{tpu_custom_call.1} parent=1 // pred_check
      _
    $region15: #{tpu_custom_call.1} parent=1 // pred_check_branch
      %65 = sbr.rel (0) target = $region17
    $region16: #{tpu_custom_call.1} parent=1 // pred_region
      %67 = vsyncadd [#allocation9], 0
      %s68 = sshll.u32 %s3, 4
      %s69 = int_to_ptr.hbm [resolvable:$true] %s68
      %s70 = sshll.u32 [#allocation8], 4
      %s71 = int_to_ptr.vmem [resolvable:$true] %s70
      %76 = dma.hbm_to_vmem [thread:$0]  %s69, 2048, %s71, [#allocation9], 128, 128, 8
    $region17: #{tpu_custom_call.1} parent=1 // pred_fallthru
      _
    // Predicated region
    $region18: #{tpu_custom_call.1} parent=1 // pred_check
      _
    $region19: #{tpu_custom_call.1} parent=1 // pred_check_branch
      %78 = sbr.rel (0) target = $region21
    $region20: #{tpu_custom_call.1} parent=1 // pred_region
      %80 = vsyncadd [#allocation9], 0
      %s82 = sshll.u32 %s4, 4
      %s83 = int_to_ptr.hbm [resolvable:$true] %s82
      %s84 = sshll.u32 [#allocation10], 4
      %s85 = int_to_ptr.vmem [resolvable:$true] %s84
      %87 = dma.hbm_to_vmem [thread:$0]  %s83, 16, %s85, [#allocation9]
    $region21: #{tpu_custom_call.1} parent=1 // pred_fallthru
      _
    // Predicated region
    $region22: #{tpu_custom_call.1} parent=1 // pred_check
      _
    $region23: #{tpu_custom_call.1} parent=1 // pred_check_branch
      %89 = sbr.rel (0) target = $region25
    $region24: #{tpu_custom_call.1} parent=1 // pred_region
      %91 = vsyncadd [#allocation12], 0
      %s92 = sshll.u32 %s5, 4
      %s93 = int_to_ptr.hbm [resolvable:$true] %s92
      %s94 = sshll.u32 [#allocation11], 4
      %s95 = int_to_ptr.vmem [resolvable:$true] %s94
      %100 = dma.hbm_to_vmem [thread:$0]  %s93, 2048, %s95, [#allocation12], 128, 128, 8
    $region25: #{tpu_custom_call.1} parent=1 // pred_fallthru
      _
    // Predicated region
    $region26: #{tpu_custom_call.1} parent=1 // pred_check
      _
    $region27: #{tpu_custom_call.1} parent=1 // pred_check_branch
      %102 = sbr.rel (0) target = $region29
    $region28: #{tpu_custom_call.1} parent=1 // pred_region
      _
    $region29: #{tpu_custom_call.1} parent=1 // pred_fallthru
      _
    // Predicated region
    $region30: #{tpu_custom_call.1} parent=1 // pred_check
      _
    $region31: #{tpu_custom_call.1} parent=1 // pred_check_branch
      %104 = sbr.rel (0) target = $region33
    $region32: #{tpu_custom_call.1} parent=1 // pred_region
      %106 = vsyncadd [#allocation12], 0
      %s107 = sshll.u32 %s7, 4
      %s108 = int_to_ptr.hbm [resolvable:$true] %s107
      %s109 = sshll.u32 [#allocation13], 4
      %s110 = int_to_ptr.vmem [resolvable:$true] %s109
      %115 = dma.hbm_to_vmem [thread:$0]  %s108, 4096, %s110, [#allocation12], 128, 128, 8
    $region33: #{tpu_custom_call.1} parent=1 // pred_fallthru
      _
    // Predicated region
    $region34: #{tpu_custom_call.1} parent=1 // pred_check
      _
    $region35: #{tpu_custom_call.1} parent=1 // pred_check_branch
      %117 = sbr.rel (0) target = $region37
    $region36: #{tpu_custom_call.1} parent=1 // pred_region
      _
    $region37: #{tpu_custom_call.1} parent=1 // pred_fallthru
      _
    // Predicated region
    $region38: #{tpu_custom_call.1} parent=1 // pred_check
      _
    $region39: #{tpu_custom_call.1} parent=1 // pred_check_branch
      %119 = sbr.rel (0) target = $region41
    $region40: #{tpu_custom_call.1} parent=1 // pred_region
      %121 = vsyncadd [#allocation15], 0
      %s122 = sshll.u32 %s9, 4
      %s123 = int_to_ptr.hbm [resolvable:$true] %s122
      %s124 = sshll.u32 [#allocation14], 4
      %s125 = int_to_ptr.vmem [resolvable:$true] %s124
      %130 = dma.hbm_to_vmem [thread:$0]  %s123, 4096, %s125, [#allocation15], 128, 128, 8
    $region41: #{tpu_custom_call.1} parent=1 // pred_fallthru
      _
    // Predicated region
    $region42: #{tpu_custom_call.1} parent=1 // pred_check
      _
    $region43: #{tpu_custom_call.1} parent=1 // pred_check_branch
      %132 = sbr.rel (0) target = $region45
    $region44: #{tpu_custom_call.1} parent=1 // pred_region
      _
    $region45: #{tpu_custom_call.1} parent=1 // pred_fallthru
      _
    // Predicated region
    $region46: #{tpu_custom_call.1} parent=1 // pred_check
      _
    $region47: #{tpu_custom_call.1} parent=1 // pred_check_branch
      %134 = sbr.rel (0) target = $region49
    $region48: #{tpu_custom_call.1} parent=1 // pred_region
      %136 = dma.done [#allocation3], 384
    $region49: #{tpu_custom_call.1} parent=1 // pred_fallthru
      _
    // Predicated region
    $region50: #{tpu_custom_call.1} parent=1 // pred_check
      _
    $region51: #{tpu_custom_call.1} parent=1 // pred_check_branch
      %138 = sbr.rel (0) target = $region53
    $region52: #{tpu_custom_call.1} parent=1 // pred_region
      %140 = dma.done [#allocation6], 6144
    $region53: #{tpu_custom_call.1} parent=1 // pred_fallthru
      _
    // Predicated region
    $region54: #{tpu_custom_call.1} parent=1 // pred_check
      _
    $region55: #{tpu_custom_call.1} parent=1 // pred_check_branch
      %142 = sbr.rel (0) target = $region57
    $region56: #{tpu_custom_call.1} parent=1 // pred_region
      %144 = dma.done [#allocation6], 48
    $region57: #{tpu_custom_call.1} parent=1 // pred_fallthru
      _
    // Predicated region
    $region58: #{tpu_custom_call.1} parent=1 // pred_check
      _
    $region59: #{tpu_custom_call.1} parent=1 // pred_check_branch
      %146 = sbr.rel (0) target = $region61
    $region60: #{tpu_custom_call.1} parent=1 // pred_region
      %148 = dma.done [#allocation9], 2048
    $region61: #{tpu_custom_call.1} parent=1 // pred_fallthru
      _
    // Predicated region
    $region62: #{tpu_custom_call.1} parent=1 // pred_check
      _
    $region63: #{tpu_custom_call.1} parent=1 // pred_check_branch
      %150 = sbr.rel (0) target = $region65
    $region64: #{tpu_custom_call.1} parent=1 // pred_region
      %152 = dma.done [#allocation9], 16
    $region65: #{tpu_custom_call.1} parent=1 // pred_fallthru
      _
    // Predicated region
    $region66: #{tpu_custom_call.1} parent=1 // pred_check
      _
    $region67: #{tpu_custom_call.1} parent=1 // pred_check_branch
      %154 = sbr.rel (0) target = $region69
    $region68: #{tpu_custom_call.1} parent=1 // pred_region
      %156 = dma.done [#allocation12], 2048
    $region69: #{tpu_custom_call.1} parent=1 // pred_fallthru
      _
    // Predicated region
    $region70: #{tpu_custom_call.1} parent=1 // pred_check
      _
    $region71: #{tpu_custom_call.1} parent=1 // pred_check_branch
      %158 = sbr.rel (0) target = $region73
    $region72: #{tpu_custom_call.1} parent=1 // pred_region
      %160 = dma.done [#allocation12], 4096
    $region73: #{tpu_custom_call.1} parent=1 // pred_fallthru
      _
    // Predicated region
    $region74: #{tpu_custom_call.1} parent=1 // pred_check
      _
    $region75: #{tpu_custom_call.1} parent=1 // pred_check_branch
      %162 = sbr.rel (0) target = $region77
    $region76: #{tpu_custom_call.1} parent=1 // pred_region
      %164 = dma.done [#allocation15], 4096
    $region77: #{tpu_custom_call.1} parent=1 // pred_fallthru
      _
    %v165 = vld [vmem:[#allocation2] sm:$0xff]
    %v166 = vld [vmem:[#allocation5] sm:$0xff]
    %v167 = vld [vmem:[#allocation5 + $0x8] sm:$0xff]
    %v168 = vld [vmem:[#allocation5 + $0x10] sm:$0xff]
    %v169 = vld [vmem:[#allocation5 + $0x18] sm:$0xff]
    %v170 = vld [vmem:[#allocation5 + $0x20] sm:$0xff]
    %v171 = vld [vmem:[#allocation5 + $0x28] sm:$0xff]
    %v172 = vld [vmem:[#allocation5 + $0x30] sm:$0xff]
    %v173 = vld [vmem:[#allocation5 + $0x38] sm:$0xff]
    %v174 = vld [vmem:[#allocation5 + $0x40] sm:$0xff]
    %v175 = vld [vmem:[#allocation5 + $0x48] sm:$0xff]
    %v176 = vld [vmem:[#allocation5 + $0x50] sm:$0xff]
    %v177 = vld [vmem:[#allocation5 + $0x58] sm:$0xff]
    %v178 = vld [vmem:[#allocation5 + $0x60] sm:$0xff]
    %v179 = vld [vmem:[#allocation5 + $0x68] sm:$0xff]
    %v180 = vld [vmem:[#allocation5 + $0x70] sm:$0xff]
    %v181 = vld [vmem:[#allocation5 + $0x78] sm:$0xff]
    %v182 = vld [vmem:[#allocation7] sm:$0x1]
    %v184 = vperm.slane %v182, 0
    %186 = vmatpush.msra.mxu0 %v181
    %187 = vmatpush.msra.mxu0 %v180
    %188 = vmatpush.msra.mxu0 %v179
    %189 = vmatpush.msra.mxu0 %v178
    %190 = vmatpush.msra.mxu0 %v177
    %191 = vmatpush.msra.mxu0 %v176
    %192 = vmatpush.msra.mxu0 %v175
    %193 = vmatpush.msra.mxu0 %v174
    %194 = vmatpush.msra.mxu0 %v173
    %195 = vmatpush.msra.mxu0 %v172
    %196 = vmatpush.msra.mxu0 %v171
    %197 = vmatpush.msra.mxu0 %v170
    %198 = vmatpush.msra.mxu0 %v169
    %199 = vmatpush.msra.mxu0 %v168
    %200 = vmatpush.msra.mxu0 %v167
    %201 = vmatpush.msra.mxu0 %v166
    %202 = vmatmul.f32.gmra.mxu0 %v165
    %v203 = vpop.f32.mrf.mxu0
    %v204 = vadd.f32 %v184, %v203
    %205 = vdwg.mxu0
    %v206 = vmax.f32 %v204, 0.0
    %s207 = scalar_lea.vmem [#allocation2], 8
    %v208 = vld [vmem:[%s207] sm:$0xff]
    %s209 = scalar_lea.vmem [#allocation5], 128
    %v210 = vld [vmem:[%s209] sm:$0xff]
    %v211 = vld [vmem:[%s209 + $0x8] sm:$0xff]
    %v212 = vld [vmem:[%s209 + $0x10] sm:$0xff]
    %v213 = vld [vmem:[%s209 + $0x18] sm:$0xff]
    %v214 = vld [vmem:[%s209 + $0x20] sm:$0xff]
    %v215 = vld [vmem:[%s209 + $0x28] sm:$0xff]
    %v216 = vld [vmem:[%s209 + $0x30] sm:$0xff]
    %v217 = vld [vmem:[%s209 + $0x38] sm:$0xff]
    %v218 = vld [vmem:[%s209 + $0x40] sm:$0xff]
    %v219 = vld [vmem:[%s209 + $0x48] sm:$0xff]
    %v220 = vld [vmem:[%s209 + $0x50] sm:$0xff]
    %v221 = vld [vmem:[%s209 + $0x58] sm:$0xff]
    %v222 = vld [vmem:[%s209 + $0x60] sm:$0xff]
    %v223 = vld [vmem:[%s209 + $0x68] sm:$0xff]
    %v224 = vld [vmem:[%s209 + $0x70] sm:$0xff]
    %v225 = vld [vmem:[%s209 + $0x78] sm:$0xff]
    %s226 = scalar_lea.vmem [#allocation7], 1
    %v227 = vld [vmem:[%s226] sm:$0x1]
    %v229 = vperm.slane %v227, 0
    %231 = vmatpush.msra.mxu0 %v225
    %232 = vmatpush.msra.mxu0 %v224
    %233 = vmatpush.msra.mxu0 %v223
    %234 = vmatpush.msra.mxu0 %v222
    %235 = vmatpush.msra.mxu0 %v221
    %236 = vmatpush.msra.mxu0 %v220
    %237 = vmatpush.msra.mxu0 %v219
    %238 = vmatpush.msra.mxu0 %v218
    %239 = vmatpush.msra.mxu0 %v217
    %240 = vmatpush.msra.mxu0 %v216
    %241 = vmatpush.msra.mxu0 %v215
    %242 = vmatpush.msra.mxu0 %v214
    %243 = vmatpush.msra.mxu0 %v213
    %244 = vmatpush.msra.mxu0 %v212
    %245 = vmatpush.msra.mxu0 %v211
    %246 = vmatpush.msra.mxu0 %v210
    %247 = vmatmul.f32.gmra.mxu0 %v208
    %v248 = vpop.f32.mrf.mxu0
    %v249 = vadd.f32 %v229, %v248
    %250 = vdwg.mxu0
    %v251 = vmax.f32 %v249, 0.0
    %s252 = scalar_lea.vmem [#allocation2], 16
    %v253 = vld [vmem:[%s252] sm:$0xff]
    %s254 = scalar_lea.vmem [#allocation5], 256
    %v255 = vld [vmem:[%s254] sm:$0xff]
    %v256 = vld [vmem:[%s254 + $0x8] sm:$0xff]
    %v257 = vld [vmem:[%s254 + $0x10] sm:$0xff]
    %v258 = vld [vmem:[%s254 + $0x18] sm:$0xff]
    %v259 = vld [vmem:[%s254 + $0x20] sm:$0xff]
    %v260 = vld [vmem:[%s254 + $0x28] sm:$0xff]
    %v261 = vld [vmem:[%s254 + $0x30] sm:$0xff]
    %v262 = vld [vmem:[%s254 + $0x38] sm:$0xff]
    %v263 = vld [vmem:[%s254 + $0x40] sm:$0xff]
    %v264 = vld [vmem:[%s254 + $0x48] sm:$0xff]
    %v265 = vld [vmem:[%s254 + $0x50] sm:$0xff]
    %v266 = vld [vmem:[%s254 + $0x58] sm:$0xff]
    %v267 = vld [vmem:[%s254 + $0x60] sm:$0xff]
    %v268 = vld [vmem:[%s254 + $0x68] sm:$0xff]
    %v269 = vld [vmem:[%s254 + $0x70] sm:$0xff]
    %v270 = vld [vmem:[%s254 + $0x78] sm:$0xff]
    %s271 = scalar_lea.vmem [#allocation7], 2
    %v272 = vld [vmem:[%s271] sm:$0x1]
    %v274 = vperm.slane %v272, 0
    %276 = vmatpush.msra.mxu0 %v270
    %277 = vmatpush.msra.mxu0 %v269
    %278 = vmatpush.msra.mxu0 %v268
    %279 = vmatpush.msra.mxu0 %v267
    %280 = vmatpush.msra.mxu0 %v266
    %281 = vmatpush.msra.mxu0 %v265
    %282 = vmatpush.msra.mxu0 %v264
    %283 = vmatpush.msra.mxu0 %v263
    %284 = vmatpush.msra.mxu0 %v262
    %285 = vmatpush.msra.mxu0 %v261
    %286 = vmatpush.msra.mxu0 %v260
    %287 = vmatpush.msra.mxu0 %v259
    %288 = vmatpush.msra.mxu0 %v258
    %289 = vmatpush.msra.mxu0 %v257
    %290 = vmatpush.msra.mxu0 %v256
    %291 = vmatpush.msra.mxu0 %v255
    %292 = vmatmul.f32.gmra.mxu0 %v253
    %v293 = vpop.f32.mrf.mxu0
    %v294 = vadd.f32 %v274, %v293
    %295 = vdwg.mxu0
    %v296 = vmax.f32 %v294, 0.0
    %v297 = vld [vmem:[#allocation8] sm:$0xff]
    %v298 = vld [vmem:[#allocation8 + $0x8] sm:$0xff]
    %v299 = vld [vmem:[#allocation8 + $0x10] sm:$0xff]
    %v300 = vld [vmem:[#allocation8 + $0x18] sm:$0xff]
    %v301 = vld [vmem:[#allocation8 + $0x20] sm:$0xff]
    %v302 = vld [vmem:[#allocation8 + $0x28] sm:$0xff]
    %v303 = vld [vmem:[#allocation8 + $0x30] sm:$0xff]
    %v304 = vld [vmem:[#allocation8 + $0x38] sm:$0xff]
    %v305 = vld [vmem:[#allocation8 + $0x40] sm:$0xff]
    %v306 = vld [vmem:[#allocation8 + $0x48] sm:$0xff]
    %v307 = vld [vmem:[#allocation8 + $0x50] sm:$0xff]
    %v308 = vld [vmem:[#allocation8 + $0x58] sm:$0xff]
    %v309 = vld [vmem:[#allocation8 + $0x60] sm:$0xff]
    %v310 = vld [vmem:[#allocation8 + $0x68] sm:$0xff]
    %v311 = vld [vmem:[#allocation8 + $0x70] sm:$0xff]
    %v312 = vld [vmem:[#allocation8 + $0x78] sm:$0xff]
    %v313 = vld [vmem:[#allocation10] sm:$0x1]
    %v315 = vperm.slane %v313, 0
    %317 = vmatpush.msra.mxu0 %v312
    %318 = vmatpush.msra.mxu0 %v311
    %319 = vmatpush.msra.mxu0 %v310
    %320 = vmatpush.msra.mxu0 %v309
    %321 = vmatpush.msra.mxu0 %v308
    %322 = vmatpush.msra.mxu0 %v307
    %323 = vmatpush.msra.mxu0 %v306
    %324 = vmatpush.msra.mxu0 %v305
    %325 = vmatpush.msra.mxu0 %v304
    %326 = vmatpush.msra.mxu0 %v303
    %327 = vmatpush.msra.mxu0 %v302
    %328 = vmatpush.msra.mxu0 %v301
    %329 = vmatpush.msra.mxu0 %v300
    %330 = vmatpush.msra.mxu0 %v299
    %331 = vmatpush.msra.mxu0 %v298
    %332 = vmatpush.msra.mxu0 %v297
    %333 = vmatmul.f32.gmra.mxu0 %v206
    %v334 = vpop.f32.mrf.mxu0
    %v335 = vadd.f32 %v315, %v334
    %336 = vmatmul.f32.gmra.mxu0 %v251
    %v337 = vpop.f32.mrf.mxu0
    %v338 = vadd.f32 %v315, %v337
    %339 = vmatmul.f32.gmra.mxu0 %v296
    %v340 = vpop.f32.mrf.mxu0
    %v341 = vadd.f32 %v315, %v340
    %342 = vdwg.mxu0
    %v343 = vmax.f32 %v335, 0.0
    %v344 = vmax.f32 %v338, 0.0
    %v345 = vmax.f32 %v341, 0.0
    %v346 = vld [vmem:[#allocation11] sm:$0xff]
    %v347 = vld [vmem:[#allocation11 + $0x8] sm:$0xff]
    %v348 = vld [vmem:[#allocation11 + $0x10] sm:$0xff]
    %v349 = vld [vmem:[#allocation11 + $0x18] sm:$0xff]
    %v350 = vld [vmem:[#allocation11 + $0x20] sm:$0xff]
    %v351 = vld [vmem:[#allocation11 + $0x28] sm:$0xff]
    %v352 = vld [vmem:[#allocation11 + $0x30] sm:$0xff]
    %v353 = vld [vmem:[#allocation11 + $0x38] sm:$0xff]
    %v354 = vld [vmem:[#allocation11 + $0x40] sm:$0xff]
    %v355 = vld [vmem:[#allocation11 + $0x48] sm:$0xff]
    %v356 = vld [vmem:[#allocation11 + $0x50] sm:$0xff]
    %v357 = vld [vmem:[#allocation11 + $0x58] sm:$0xff]
    %v358 = vld [vmem:[#allocation11 + $0x60] sm:$0xff]
    %v359 = vld [vmem:[#allocation11 + $0x68] sm:$0xff]
    %v360 = vld [vmem:[#allocation11 + $0x70] sm:$0xff]
    %v361 = vld [vmem:[#allocation11 + $0x78] sm:$0xff]
    %v362 = vld [vmem:[%s6] sm:$0x1]
    %v364 = vperm.slane %v362, 0
    %366 = vmatpush.msra.mxu0 %v361
    %367 = vmatpush.msra.mxu0 %v360
    %368 = vmatpush.msra.mxu0 %v359
    %369 = vmatpush.msra.mxu0 %v358
    %370 = vmatpush.msra.mxu0 %v357
    %371 = vmatpush.msra.mxu0 %v356
    %372 = vmatpush.msra.mxu0 %v355
    %373 = vmatpush.msra.mxu0 %v354
    %374 = vmatpush.msra.mxu0 %v353
    %375 = vmatpush.msra.mxu0 %v352
    %376 = vmatpush.msra.mxu0 %v351
    %377 = vmatpush.msra.mxu0 %v350
    %378 = vmatpush.msra.mxu0 %v349
    %379 = vmatpush.msra.mxu0 %v348
    %380 = vmatpush.msra.mxu0 %v347
    %381 = vmatpush.msra.mxu0 %v346
    %382 = vmatmul.f32.gmra.mxu0 %v343
    %v383 = vpop.f32.mrf.mxu0
    %v384 = vadd.f32 %v364, %v383
    %385 = vmatmul.f32.gmra.mxu0 %v344
    %v386 = vpop.f32.mrf.mxu0
    %v387 = vadd.f32 %v364, %v386
    %388 = vmatmul.f32.gmra.mxu0 %v345
    %v389 = vpop.f32.mrf.mxu0
    %v390 = vadd.f32 %v364, %v389
    %391 = vdwg.mxu0
    %392 = vst [vmem:[#allocation16] sm:$0xff] %v384
    %393 = vst [vmem:[#allocation16 + $0x8] sm:$0xff] %v387
    %394 = vst [vmem:[#allocation16 + $0x10] sm:$0xff] %v390
    %v395 = vld [vmem:[#allocation13] sm:$0xff]
    %v396 = vld [vmem:[#allocation13 + $0x8] sm:$0xff]
    %v397 = vld [vmem:[#allocation13 + $0x10] sm:$0xff]
    %v398 = vld [vmem:[#allocation13 + $0x18] sm:$0xff]
    %v399 = vld [vmem:[#allocation13 + $0x20] sm:$0xff]
    %v400 = vld [vmem:[#allocation13 + $0x28] sm:$0xff]
    %v401 = vld [vmem:[#allocation13 + $0x30] sm:$0xff]
    %v402 = vld [vmem:[#allocation13 + $0x38] sm:$0xff]
    %v403 = vld [vmem:[#allocation13 + $0x40] sm:$0xff]
    %v404 = vld [vmem:[#allocation13 + $0x48] sm:$0xff]
    %v405 = vld [vmem:[#allocation13 + $0x50] sm:$0xff]
    %v406 = vld [vmem:[#allocation13 + $0x58] sm:$0xff]
    %v407 = vld [vmem:[#allocation13 + $0x60] sm:$0xff]
    %v408 = vld [vmem:[#allocation13 + $0x68] sm:$0xff]
    %v409 = vld [vmem:[#allocation13 + $0x70] sm:$0xff]
    %v410 = vld [vmem:[#allocation13 + $0x78] sm:$0xff]
    %v411 = vld [vmem:[%s8] sm:$0x1]
    %v413 = vperm.slane %v411, 0
    %415 = vmatpush.msra.mxu0 %v410
    %416 = vmatpush.msra.mxu0 %v409
    %417 = vmatpush.msra.mxu0 %v408
    %418 = vmatpush.msra.mxu0 %v407
    %419 = vmatpush.msra.mxu0 %v406
    %420 = vmatpush.msra.mxu0 %v405
    %421 = vmatpush.msra.mxu0 %v404
    %422 = vmatpush.msra.mxu0 %v403
    %423 = vmatpush.msra.mxu0 %v402
    %424 = vmatpush.msra.mxu0 %v401
    %425 = vmatpush.msra.mxu0 %v400
    %426 = vmatpush.msra.mxu0 %v399
    %427 = vmatpush.msra.mxu0 %v398
    %428 = vmatpush.msra.mxu0 %v397
    %429 = vmatpush.msra.mxu0 %v396
    %430 = vmatpush.msra.mxu0 %v395
    %431 = vmatmul.f32.gmra.mxu0 %v387
    %v432 = vpop.f32.mrf.mxu0
    %v433 = vadd.f32 %v413, %v432
    %434 = vdwg.mxu0
    %v435 = vmax.f32 %v433, 0.0
    %v436 = vld [vmem:[#allocation14] sm:$0xff]
    %v437 = vld [vmem:[#allocation14 + $0x8] sm:$0xff]
    %v438 = vld [vmem:[#allocation14 + $0x10] sm:$0xff]
    %v439 = vld [vmem:[#allocation14 + $0x18] sm:$0xff]
    %v440 = vld [vmem:[#allocation14 + $0x20] sm:$0xff]
    %v441 = vld [vmem:[#allocation14 + $0x28] sm:$0xff]
    %v442 = vld [vmem:[#allocation14 + $0x30] sm:$0xff]
    %v443 = vld [vmem:[#allocation14 + $0x38] sm:$0xff]
    %v444 = vld [vmem:[#allocation14 + $0x40] sm:$0xff]
    %v445 = vld [vmem:[#allocation14 + $0x48] sm:$0xff]
    %v446 = vld [vmem:[#allocation14 + $0x50] sm:$0xff]
    %v447 = vld [vmem:[#allocation14 + $0x58] sm:$0xff]
    %v448 = vld [vmem:[#allocation14 + $0x60] sm:$0xff]
    %v449 = vld [vmem:[#allocation14 + $0x68] sm:$0xff]
    %v450 = vld [vmem:[#allocation14 + $0x70] sm:$0xff]
    %v451 = vld [vmem:[#allocation14 + $0x78] sm:$0xff]
    %v452 = vld [vmem:[%s10] sm:$0x1]
    %v454 = vperm.slane %v452, 0
    %456 = vmatpush.msra.mxu0 %v451
    %457 = vmatpush.msra.mxu0 %v450
    %458 = vmatpush.msra.mxu0 %v449
    %459 = vmatpush.msra.mxu0 %v448
    %460 = vmatpush.msra.mxu0 %v447
    %461 = vmatpush.msra.mxu0 %v446
    %462 = vmatpush.msra.mxu0 %v445
    %463 = vmatpush.msra.mxu0 %v444
    %464 = vmatpush.msra.mxu0 %v443
    %465 = vmatpush.msra.mxu0 %v442
    %466 = vmatpush.msra.mxu0 %v441
    %467 = vmatpush.msra.mxu0 %v440
    %468 = vmatpush.msra.mxu0 %v439
    %469 = vmatpush.msra.mxu0 %v438
    %470 = vmatpush.msra.mxu0 %v437
    %471 = vmatpush.msra.mxu0 %v436
    %472 = vmatmul.f32.gmra.mxu0 %v435
    %v473 = vpop.f32.mrf.mxu0
    %v474 = vadd.f32 %v454, %v473
    %475 = vdwg.mxu0
    %476 = vst [vmem:[#allocation17] sm:$0xff] %v474
    %s477 = scalar_lea.vmem [#allocation13], 128
    %v478 = vld [vmem:[%s477] sm:$0xff]
    %v479 = vld [vmem:[%s477 + $0x8] sm:$0xff]
    %v480 = vld [vmem:[%s477 + $0x10] sm:$0xff]
    %v481 = vld [vmem:[%s477 + $0x18] sm:$0xff]
    %v482 = vld [vmem:[%s477 + $0x20] sm:$0xff]
    %v483 = vld [vmem:[%s477 + $0x28] sm:$0xff]
    %v484 = vld [vmem:[%s477 + $0x30] sm:$0xff]
    %v485 = vld [vmem:[%s477 + $0x38] sm:$0xff]
    %v486 = vld [vmem:[%s477 + $0x40] sm:$0xff]
    %v487 = vld [vmem:[%s477 + $0x48] sm:$0xff]
    %v488 = vld [vmem:[%s477 + $0x50] sm:$0xff]
    %v489 = vld [vmem:[%s477 + $0x58] sm:$0xff]
    %v490 = vld [vmem:[%s477 + $0x60] sm:$0xff]
    %v491 = vld [vmem:[%s477 + $0x68] sm:$0xff]
    %v492 = vld [vmem:[%s477 + $0x70] sm:$0xff]
    %v493 = vld [vmem:[%s477 + $0x78] sm:$0xff]
    %s494 = scalar_lea.vmem %s8, 1
    %v495 = vld [vmem:[%s494] sm:$0x1]
    %v497 = vperm.slane %v495, 0
    %499 = vmatpush.msra.mxu0 %v493
    %500 = vmatpush.msra.mxu0 %v492
    %501 = vmatpush.msra.mxu0 %v491
    %502 = vmatpush.msra.mxu0 %v490
    %503 = vmatpush.msra.mxu0 %v489
    %504 = vmatpush.msra.mxu0 %v488
    %505 = vmatpush.msra.mxu0 %v487
    %506 = vmatpush.msra.mxu0 %v486
    %507 = vmatpush.msra.mxu0 %v485
    %508 = vmatpush.msra.mxu0 %v484
    %509 = vmatpush.msra.mxu0 %v483
    %510 = vmatpush.msra.mxu0 %v482
    %511 = vmatpush.msra.mxu0 %v481
    %512 = vmatpush.msra.mxu0 %v480
    %513 = vmatpush.msra.mxu0 %v479
    %514 = vmatpush.msra.mxu0 %v478
    %515 = vmatmul.f32.gmra.mxu0 %v390
    %v516 = vpop.f32.mrf.mxu0
    %v517 = vadd.f32 %v497, %v516
    %518 = vdwg.mxu0
    %v519 = vmax.f32 %v517, 0.0
    %s520 = scalar_lea.vmem [#allocation14], 128
    %v521 = vld [vmem:[%s520] sm:$0xff]
    %v522 = vld [vmem:[%s520 + $0x8] sm:$0xff]
    %v523 = vld [vmem:[%s520 + $0x10] sm:$0xff]
    %v524 = vld [vmem:[%s520 + $0x18] sm:$0xff]
    %v525 = vld [vmem:[%s520 + $0x20] sm:$0xff]
    %v526 = vld [vmem:[%s520 + $0x28] sm:$0xff]
    %v527 = vld [vmem:[%s520 + $0x30] sm:$0xff]
    %v528 = vld [vmem:[%s520 + $0x38] sm:$0xff]
    %v529 = vld [vmem:[%s520 + $0x40] sm:$0xff]
    %v530 = vld [vmem:[%s520 + $0x48] sm:$0xff]
    %v531 = vld [vmem:[%s520 + $0x50] sm:$0xff]
    %v532 = vld [vmem:[%s520 + $0x58] sm:$0xff]
    %v533 = vld [vmem:[%s520 + $0x60] sm:$0xff]
    %v534 = vld [vmem:[%s520 + $0x68] sm:$0xff]
    %v535 = vld [vmem:[%s520 + $0x70] sm:$0xff]
    %v536 = vld [vmem:[%s520 + $0x78] sm:$0xff]
    %s537 = scalar_lea.vmem %s10, 1
    %v538 = vld [vmem:[%s537] sm:$0x1]
    %v540 = vperm.slane %v538, 0
    %542 = vmatpush.msra.mxu0 %v536
    %543 = vmatpush.msra.mxu0 %v535
    %544 = vmatpush.msra.mxu0 %v534
    %545 = vmatpush.msra.mxu0 %v533
    %546 = vmatpush.msra.mxu0 %v532
    %547 = vmatpush.msra.mxu0 %v531
    %548 = vmatpush.msra.mxu0 %v530
    %549 = vmatpush.msra.mxu0 %v529
    %550 = vmatpush.msra.mxu0 %v528
    %551 = vmatpush.msra.mxu0 %v527
    %552 = vmatpush.msra.mxu0 %v526
    %553 = vmatpush.msra.mxu0 %v525
    %554 = vmatpush.msra.mxu0 %v524
    %555 = vmatpush.msra.mxu0 %v523
    %556 = vmatpush.msra.mxu0 %v522
    %557 = vmatpush.msra.mxu0 %v521
    %558 = vmatmul.f32.gmra.mxu0 %v519
    %v559 = vpop.f32.mrf.mxu0
    %v560 = vadd.f32 %v540, %v559
    %561 = vdwg.mxu0
    %562 = vst [vmem:[#allocation17 + $0x8] sm:$0xff] %v560
    // Predicated region
    $region78: #{tpu_custom_call.1} parent=1 // pred_check
      _
    $region79: #{tpu_custom_call.1} parent=1 // pred_check_branch
      %564 = sbr.rel (0) target = $region81
    $region80: #{tpu_custom_call.1} parent=1 // pred_region
      %566 = vsyncadd [#allocation4], 0
      %s567 = sshll.u32 [#allocation16], 4
      %s568 = int_to_ptr.vmem [resolvable:$true] %s567
      %s569 = sshll.u32 %s11, 4
      %s570 = int_to_ptr.hbm [resolvable:$true] %s569
      %575 = dma.vmem_to_hbm [thread:$0]  %s568, 384, %s570, [#allocation4], 128, 128, 8
    $region81: #{tpu_custom_call.1} parent=1 // pred_fallthru
      _
    // Predicated region
    $region82: #{tpu_custom_call.1} parent=1 // pred_check
      _
    $region83: #{tpu_custom_call.1} parent=1 // pred_check_branch
      %577 = sbr.rel (0) target = $region85
    $region84: #{tpu_custom_call.1} parent=1 // pred_region
      %579 = vsyncadd [#allocation18], 0
      %s580 = sshll.u32 [#allocation17], 4
      %s581 = int_to_ptr.vmem [resolvable:$true] %s580
      %s582 = sshll.u32 %s12, 4
      %s583 = int_to_ptr.hbm [resolvable:$true] %s582
      %588 = dma.vmem_to_hbm [thread:$0]  %s581, 256, %s583, [#allocation18], 128, 128, 8
    $region85: #{tpu_custom_call.1} parent=1 // pred_fallthru
      _
    // Predicated region
    $region86: #{tpu_custom_call.1} parent=1 // pred_check
      _
    $region87: #{tpu_custom_call.1} parent=1 // pred_check_branch
      %590 = sbr.rel (0) target = $region89
    $region88: #{tpu_custom_call.1} parent=1 // pred_region
      %592 = dma.done [#allocation4], 384
    $region89: #{tpu_custom_call.1} parent=1 // pred_fallthru
      _
    // Predicated region
    $region90: #{tpu_custom_call.1} parent=1 // pred_check
      _
    $region91: #{tpu_custom_call.1} parent=1 // pred_check_branch
      %594 = sbr.rel (0) target = $region93
    $region92: #{tpu_custom_call.1} parent=1 // pred_region
      %596 = dma.done [#allocation18], 256
    $region93: #{tpu_custom_call.1} parent=1 // pred_fallthru
      _
    %597 = vsyncpa [#allocation3], 1
    %598 = vsyncpa [#allocation6], 1
    %599 = vsyncpa [#allocation9], 1
    %600 = vsyncpa [#allocation12], 1
    %601 = vsyncpa [#allocation15], 1
    %602 = vsyncpa [#allocation4], 1
    %603 = vsyncpa [#allocation18], 1

</llo_original>
